<compile_context>
chip_gen: v7x
topology: tpu7x:2x2x1
jax: 0.10.0
libtpu: 0.0.40
codegen_flags: <defaults>
</compile_context>

<pallas_src>
import functools

import jax
import jax.numpy as jnp
from jax.experimental import pallas as pl
from jax.experimental.pallas import tpu as pltpu

LANE = 128  # TPU lane width


def _round_up(n: int, m: int) -> int:
    return ((n + m - 1) // m) * m


def _mlp_kernel(x_ref, w1_ref, b1_ref, w2_ref, b2_ref, w3_ref, b3_ref, o_ref):
    # Layer 1: (TB, Fp)bf16 @ (Fp, Hp)bf16 -> f32 acc; bias + sigmoid in f32 (EUP).
    h = jnp.dot(x_ref[...], w1_ref[...], preferred_element_type=jnp.float32)
    h = jax.nn.sigmoid(h + b1_ref[...])
    # Layer 2: (TB, Hp) @ (Hp, Hp)
    h = jnp.dot(h.astype(jnp.bfloat16), w2_ref[...],
                preferred_element_type=jnp.float32)
    h = jax.nn.sigmoid(h + b2_ref[...])
    # Layer 3 (predict): (TB, Hp) @ (Hp, Op)
    h = jnp.dot(h.astype(jnp.bfloat16), w3_ref[...],
                preferred_element_type=jnp.float32)
    h = jax.nn.sigmoid(h + b3_ref[...])
    o_ref[...] = h.astype(o_ref.dtype)  # lane-dense (TB, Op) unmasked store


@functools.partial(jax.jit, static_argnames=("block_batch",))
def mlp_forward(x, w1, b1, w2, b2, w3, b3, *, block_batch=256):
    """Pallas MLP forward.

    x:  (B, F) f32
    w*: (in, out) f32 (transposed vs. torch.nn.Linear.weight)
    b*: (1, out) f32
    Returns (B, n_output) f32.
    """
    B, F = x.shape
    H = w1.shape[1]
    O = w3.shape[1]

    # Lane-pad contraction / output dims to 128.
    Fp = _round_up(F, LANE)
    Hp = _round_up(H, LANE)
    Op = _round_up(O, LANE)

    # Batch tile: at least a full sublane group (8), at most block_batch rows.
    TB = min(block_batch, _round_up(B, 8))
    Bp = _round_up(B, TB)
    grid = (pl.cdiv(Bp, TB),)

    def pad2(a, rows, cols):
        return jnp.pad(a, ((0, rows - a.shape[0]), (0, cols - a.shape[1])))

    # bf16 operands for the MXU; biases stay f32 (added post-accumulation).
    xp = pad2(x, Bp, Fp).astype(jnp.bfloat16)
    w1p = pad2(w1, Fp, Hp).astype(jnp.bfloat16)
    w2p = pad2(w2, Hp, Hp).astype(jnp.bfloat16)
    w3p = pad2(w3, Hp, Op).astype(jnp.bfloat16)
    b1p = pad2(b1, 1, Hp)
    b2p = pad2(b2, 1, Hp)
    b3p = pad2(b3, 1, Op)

    flops = 2 * Bp * (Fp * Hp + Hp * Hp + Hp * Op)
    transcendentals = Bp * (Hp + Hp + Op)  # one exp per sigmoid output
    bytes_accessed = (
        xp.size * 2 + w1p.size * 2 + w2p.size * 2 + w3p.size * 2
        + b1p.size * 4 + b2p.size * 4 + b3p.size * 4 + Bp * Op * 4
    )

    out_padded = pl.pallas_call(
        _mlp_kernel,
        out_shape=jax.ShapeDtypeStruct((Bp, Op), jnp.float32),
        grid=grid,
        in_specs=[
            # x tile marches over the batch axis (pipelined / double-buffered).
            pl.BlockSpec((TB, Fp), lambda i: (i, 0)),
            # Weights & biases: constant block index -> resident in VMEM, one DMA.
            pl.BlockSpec((Fp, Hp), lambda i: (0, 0)),
            pl.BlockSpec((1, Hp), lambda i: (0, 0)),
            pl.BlockSpec((Hp, Hp), lambda i: (0, 0)),
            pl.BlockSpec((1, Hp), lambda i: (0, 0)),
            pl.BlockSpec((Hp, Op), lambda i: (0, 0)),
            pl.BlockSpec((1, Op), lambda i: (0, 0)),
        ],
        out_specs=pl.BlockSpec((TB, Op), lambda i: (i, 0)),
        compiler_params=pltpu.CompilerParams(
            # Batch tiles are independent -> shard across v7x's two TensorCores.
            dimension_semantics=("parallel",),
        ),
        cost_estimate=pl.CostEstimate(
            flops=flops,
            transcendentals=transcendentals,
            bytes_accessed=bytes_accessed,
        ),
    )(xp, w1p, b1p, w2p, b2p, w3p, b3p)

    # Slice away batch padding and padded output lanes (sigmoid(0)=0.5 junk).
    return out_padded[:B, :O]


def init_params(key, n_feature, n_hidden, n_output):
    """Deterministic init mimicking nn.Linear's U(-1/sqrt(fan_in), +1/sqrt(fan_in))."""
    ks = jax.random.split(key, 6)

    def linear(kw, kb, fan_in, fan_out):
        bound = 1.0 / jnp.sqrt(jnp.float32(fan_in))
        w = jax.random.uniform(kw, (fan_in, fan_out), jnp.float32, -bound, bound)
        b = jax.random.uniform(kb, (1, fan_out), jnp.float32, -bound, bound)
        return w, b

    w1, b1 = linear(ks[0], ks[1], n_feature, n_hidden)
    w2, b2 = linear(ks[2], ks[3], n_hidden, n_hidden)
    w3, b3 = linear(ks[4], ks[5], n_hidden, n_output)
    return w1, b1, w2, b2, w3, b3


def _reference(x, w1, b1, w2, b2, w3, b3):
    h = jax.nn.sigmoid(x @ w1 + b1)
    h = jax.nn.sigmoid(h @ w2 + b2)
    return jax.nn.sigmoid(h @ w3 + b3)


if __name__ == "__main__":
    # Small shapes consistent with Net(n_feature, n_hidden, num_hidden, n_output).
    batch, n_feature, n_hidden, n_output = 8, 32, 32, 16

    key = jax.random.PRNGKey(0)
    kx, kp, kx2 = jax.random.split(key, 3)
    x = jax.random.normal(kx, (batch, n_feature), dtype=jnp.float32)
    params = init_params(kp, n_feature, n_hidden, n_output)

    out = mlp_forward(x, *params)
    jax.block_until_ready(out)

    ref = _reference(x, *params)
    assert out.shape == (batch, n_output)
    # bf16 matmul operands with f32 accumulation -> loosened tolerance.
    assert jnp.allclose(out, ref, atol=2e-2, rtol=2e-2), (
        float(jnp.max(jnp.abs(out - ref))))

    # Exercise the multi-tile (pipelined) path: batch not a multiple of the tile.
    x2 = jax.random.normal(kx2, (260, n_feature), dtype=jnp.float32)
    out2 = mlp_forward(x2, *params, block_batch=128)
    jax.block_until_ready(out2)
    ref2 = _reference(x2, *params)
    assert out2.shape == (260, n_output)
    assert jnp.allclose(out2, ref2, atol=2e-2, rtol=2e-2), (
        float(jnp.max(jnp.abs(out2 - ref2))))

    print("KERNEL_OK")
</pallas_src>

<mosaic_0001>
module attributes {stable_mosaic.version = 11 : i64} {
  func.func @_mlp_kernel(%arg0: i32, %arg1: memref<8x128xbf16, #tpu.memory_space<vmem>>, %arg2: memref<128x128xbf16, #tpu.memory_space<vmem>>, %arg3: memref<1x128xf32, #tpu.memory_space<vmem>>, %arg4: memref<128x128xbf16, #tpu.memory_space<vmem>>, %arg5: memref<1x128xf32, #tpu.memory_space<vmem>>, %arg6: memref<128x128xbf16, #tpu.memory_space<vmem>>, %arg7: memref<1x128xf32, #tpu.memory_space<vmem>>, %arg8: memref<8x128xf32, #tpu.memory_space<vmem>>) attributes {dimension_semantics = [#tpu.dimension_semantics<parallel>], iteration_bounds = array<i64: 1>, scalar_prefetch = 0 : i64, scratch_operands = 0 : i64, tpu.core_type = #tpu.core_type<tc>, window_params = [{transform_indices = @transform_0, window_bounds = array<i64: 8, 128>}, {pipeline_mode = #tpu.pipeline_mode<synchronous>, transform_indices = @transform_1, window_bounds = array<i64: 128, 128>}, {pipeline_mode = #tpu.pipeline_mode<synchronous>, transform_indices = @transform_2, window_bounds = array<i64: 1, 128>}, {pipeline_mode = #tpu.pipeline_mode<synchronous>, transform_indices = @transform_3, window_bounds = array<i64: 128, 128>}, {pipeline_mode = #tpu.pipeline_mode<synchronous>, transform_indices = @transform_4, window_bounds = array<i64: 1, 128>}, {pipeline_mode = #tpu.pipeline_mode<synchronous>, transform_indices = @transform_5, window_bounds = array<i64: 128, 128>}, {pipeline_mode = #tpu.pipeline_mode<synchronous>, transform_indices = @transform_6, window_bounds = array<i64: 1, 128>}, {transform_indices = @transform_7, window_bounds = array<i64: 8, 128>}]} {
    %c0 = arith.constant 0 : index
    %c0_0 = arith.constant 0 : index
    %0 = vector.load %arg1[%c0, %c0_0] : memref<8x128xbf16, #tpu.memory_space<vmem>>, vector<8x128xbf16>
    %c0_1 = arith.constant 0 : index
    %c0_2 = arith.constant 0 : index
    %1 = vector.load %arg2[%c0_1, %c0_2] : memref<128x128xbf16, #tpu.memory_space<vmem>>, vector<128x128xbf16>
    %cst = arith.constant dense<0.000000e+00> : vector<8x128xf32>
    %2 = tpu.matmul %0, %1, %cst {dimension_numbers = #tpu.dot_dimension_numbers<[1], [0], [0], [1], [0, 0, 1, 1], [], []>} : vector<8x128xbf16>, vector<128x128xbf16>, vector<8x128xf32> -> vector<8x128xf32>
    %c0_3 = arith.constant 0 : index
    %c0_4 = arith.constant 0 : index
    %3 = vector.load %arg3[%c0_3, %c0_4] : memref<1x128xf32, #tpu.memory_space<vmem>>, vector<1x128xf32>
    %4 = vector.broadcast %3 : vector<1x128xf32> to vector<8x128xf32>
    %5 = arith.addf %2, %4 : vector<8x128xf32>
    %6 = arith.negf %5 : vector<8x128xf32>
    %7 = math.exp %6 : vector<8x128xf32>
    %cst_5 = arith.constant 1.000000e+00 : f32
    %8 = vector.broadcast %cst_5 : f32 to vector<8x128xf32>
    %9 = arith.addf %8, %7 : vector<8x128xf32>
    %10 = arith.divf %8, %9 : vector<8x128xf32>
    %11 = arith.truncf %10 : vector<8x128xf32> to vector<8x128xbf16>
    %c0_6 = arith.constant 0 : index
    %c0_7 = arith.constant 0 : index
    %12 = vector.load %arg4[%c0_6, %c0_7] : memref<128x128xbf16, #tpu.memory_space<vmem>>, vector<128x128xbf16>
    %cst_8 = arith.constant dense<0.000000e+00> : vector<8x128xf32>
    %13 = tpu.matmul %11, %12, %cst_8 {dimension_numbers = #tpu.dot_dimension_numbers<[1], [0], [0], [1], [0, 0, 1, 1], [], []>} : vector<8x128xbf16>, vector<128x128xbf16>, vector<8x128xf32> -> vector<8x128xf32>
    %c0_9 = arith.constant 0 : index
    %c0_10 = arith.constant 0 : index
    %14 = vector.load %arg5[%c0_9, %c0_10] : memref<1x128xf32, #tpu.memory_space<vmem>>, vector<1x128xf32>
    %15 = vector.broadcast %14 : vector<1x128xf32> to vector<8x128xf32>
    %16 = arith.addf %13, %15 : vector<8x128xf32>
    %17 = arith.negf %16 : vector<8x128xf32>
    %18 = math.exp %17 : vector<8x128xf32>
    %cst_11 = arith.constant 1.000000e+00 : f32
    %19 = vector.broadcast %cst_11 : f32 to vector<8x128xf32>
    %20 = arith.addf %19, %18 : vector<8x128xf32>
    %21 = arith.divf %19, %20 : vector<8x128xf32>
    %22 = arith.truncf %21 : vector<8x128xf32> to vector<8x128xbf16>
    %c0_12 = arith.constant 0 : index
    %c0_13 = arith.constant 0 : index
    %23 = vector.load %arg6[%c0_12, %c0_13] : memref<128x128xbf16, #tpu.memory_space<vmem>>, vector<128x128xbf16>
    %cst_14 = arith.constant dense<0.000000e+00> : vector<8x128xf32>
    %24 = tpu.matmul %22, %23, %cst_14 {dimension_numbers = #tpu.dot_dimension_numbers<[1], [0], [0], [1], [0, 0, 1, 1], [], []>} : vector<8x128xbf16>, vector<128x128xbf16>, vector<8x128xf32> -> vector<8x128xf32>
    %c0_15 = arith.constant 0 : index
    %c0_16 = arith.constant 0 : index
    %25 = vector.load %arg7[%c0_15, %c0_16] : memref<1x128xf32, #tpu.memory_space<vmem>>, vector<1x128xf32>
    %26 = vector.broadcast %25 : vector<1x128xf32> to vector<8x128xf32>
    %27 = arith.addf %24, %26 : vector<8x128xf32>
    %28 = arith.negf %27 : vector<8x128xf32>
    %29 = math.exp %28 : vector<8x128xf32>
    %cst_17 = arith.constant 1.000000e+00 : f32
    %30 = vector.broadcast %cst_17 : f32 to vector<8x128xf32>
    %31 = arith.addf %30, %29 : vector<8x128xf32>
    %32 = arith.divf %30, %31 : vector<8x128xf32>
    %c0_18 = arith.constant 0 : index
    %c0_19 = arith.constant 0 : index
    %33 = vector.load %arg8[%c0_18, %c0_19] : memref<8x128xf32, #tpu.memory_space<vmem>>, vector<8x128xf32>
    tpu.vector_store %arg8[%c0_18, %c0_19], %32 {strides = array<i32>} : memref<8x128xf32, #tpu.memory_space<vmem>>, vector<8x128xf32>,
    return
  }
  func.func @transform_0(%arg0: i32) -> (i32, i32) {
    %c0_i32 = arith.constant 0 : i32
    %c0_i32_0 = arith.constant 0 : i32
    return %arg0, %c0_i32 : i32, i32
  }
  func.func @transform_1(%arg0: i32) -> (i32, i32) {
    %c0_i32 = arith.constant 0 : i32
    %c0_i32_0 = arith.constant 0 : i32
    %c0_i32_1 = arith.constant 0 : i32
    return %c0_i32, %c0_i32_0 : i32, i32
  }
  func.func @transform_2(%arg0: i32) -> (i32, i32) {
    %c0_i32 = arith.constant 0 : i32
    %c0_i32_0 = arith.constant 0 : i32
    %c0_i32_1 = arith.constant 0 : i32
    return %c0_i32, %c0_i32_0 : i32, i32
  }
  func.func @transform_3(%arg0: i32) -> (i32, i32) {
    %c0_i32 = arith.constant 0 : i32
    %c0_i32_0 = arith.constant 0 : i32
    %c0_i32_1 = arith.constant 0 : i32
    return %c0_i32, %c0_i32_0 : i32, i32
  }
  func.func @transform_4(%arg0: i32) -> (i32, i32) {
    %c0_i32 = arith.constant 0 : i32
    %c0_i32_0 = arith.constant 0 : i32
    %c0_i32_1 = arith.constant 0 : i32
    return %c0_i32, %c0_i32_0 : i32, i32
  }
  func.func @transform_5(%arg0: i32) -> (i32, i32) {
    %c0_i32 = arith.constant 0 : i32
    %c0_i32_0 = arith.constant 0 : i32
    %c0_i32_1 = arith.constant 0 : i32
    return %c0_i32, %c0_i32_0 : i32, i32
  }
  func.func @transform_6(%arg0: i32) -> (i32, i32) {
    %c0_i32 = arith.constant 0 : i32
    %c0_i32_0 = arith.constant 0 : i32
    %c0_i32_1 = arith.constant 0 : i32
    return %c0_i32, %c0_i32_0 : i32, i32
  }
  func.func @transform_7(%arg0: i32) -> (i32, i32) {
    %c0_i32 = arith.constant 0 : i32
    %c0_i32_0 = arith.constant 0 : i32
    return %arg0, %c0_i32 : i32, i32
  }
}

</mosaic_0001>

<llo_original>
// kernel: mlp_forward.1
$region0: #{mlp_forward.1}
  #allocation0 [shape = 'u32[]', space=smem, size = 0x4, offset = 0x4, fixed_abs, tag = 'smem constant byte address 0x4 - core index']
  #allocation1 [shape = 'u32[144,128]{1,0:T(1,128)}', space=vmem, size = 0x12000, scoped, tag = 'internal scratch']
  %s0 = inlined_call_operand.vmem [shape: bf16[8,128], index: 0, kind: input, shape index: {}]
  %s1 = inlined_call_operand.vmem [shape: bf16[128,128], index: 1, kind: input, shape index: {}]
  %s2 = inlined_call_operand.vmem [shape: f32[1,128], index: 2, kind: input, shape index: {}]
  %s3 = inlined_call_operand.vmem [shape: bf16[128,128], index: 3, kind: input, shape index: {}]
  %s4 = inlined_call_operand.vmem [shape: f32[1,128], index: 4, kind: input, shape index: {}]
  %s5 = inlined_call_operand.vmem [shape: bf16[128,128], index: 5, kind: input, shape index: {}]
  %s6 = inlined_call_operand.vmem [shape: f32[1,128], index: 6, kind: input, shape index: {}]
  %s7 = inlined_call_operand.hbm [shape: f32[8,128], index: 7, kind: output, shape index: {}]
  %s8 = sld [smem:[#allocation0]]
  $region38: #{mlp_forward.1} parent=0
    _
  %s10 = ssub.s32 1, %s8
  %s11 = scalar_select 0, %s10, %s8
  $region1: #{mlp_forward.1} parent=0
    #allocation2 [shape = 'u8[4096]{0}', space=vmem, size = 0x1000, scoped, tag = 'output window, operand 0, single buffered']
    #allocation3 [shape = 's32[1]{0}', space=sflag, size = 0x4, scoped, tag = 'scoped memory for mlp_forward.1']
    %12 = vsyncpa [#allocation3], 0
    // Predicated region
    $region2: #{mlp_forward.1} parent=1 // pred_check
      _
    $region3: #{mlp_forward.1} parent=1 // pred_check_branch
      %14 = sbr.rel (0) target = $region5
    $region4: #{mlp_forward.1} parent=1 // pred_region
      _
    $region5: #{mlp_forward.1} parent=1 // pred_fallthru
      _
    // Predicated region
    $region6: #{mlp_forward.1} parent=1 // pred_check
      _
    $region7: #{mlp_forward.1} parent=1 // pred_check_branch
      %16 = sbr.rel (0) target = $region9
    $region8: #{mlp_forward.1} parent=1 // pred_region
      _
    $region9: #{mlp_forward.1} parent=1 // pred_fallthru
      _
    // Predicated region
    $region10: #{mlp_forward.1} parent=1 // pred_check
      _
    $region11: #{mlp_forward.1} parent=1 // pred_check_branch
      %18 = sbr.rel (0) target = $region13
    $region12: #{mlp_forward.1} parent=1 // pred_region
      _
    $region13: #{mlp_forward.1} parent=1 // pred_fallthru
      _
    // Predicated region
    $region14: #{mlp_forward.1} parent=1 // pred_check
      _
    $region15: #{mlp_forward.1} parent=1 // pred_check_branch
      %20 = sbr.rel (0) target = $region17
    $region16: #{mlp_forward.1} parent=1 // pred_region
      _
    $region17: #{mlp_forward.1} parent=1 // pred_fallthru
      _
    // Predicated region
    $region18: #{mlp_forward.1} parent=1 // pred_check
      _
    $region19: #{mlp_forward.1} parent=1 // pred_check_branch
      %22 = sbr.rel (0) target = $region21
    $region20: #{mlp_forward.1} parent=1 // pred_region
      _
    $region21: #{mlp_forward.1} parent=1 // pred_fallthru
      _
    // Predicated region
    $region22: #{mlp_forward.1} parent=1 // pred_check
      _
    $region23: #{mlp_forward.1} parent=1 // pred_check_branch
      %24 = sbr.rel (0) target = $region25
    $region24: #{mlp_forward.1} parent=1 // pred_region
      _
    $region25: #{mlp_forward.1} parent=1 // pred_fallthru
      _
    // Predicated region
    $region26: #{mlp_forward.1} parent=1 // pred_check
      _
    $region27: #{mlp_forward.1} parent=1 // pred_check_branch
      %26 = sbr.rel (0) target = $region29
    $region28: #{mlp_forward.1} parent=1 // pred_region
      _
    $region29: #{mlp_forward.1} parent=1 // pred_fallthru
      _
    %v28 = vld [vmem:[%s0] sm:$0xf]
    %v29 = vld [vmem:[%s1] sm:$0xf]
    %v30 = vld [vmem:[%s1 + $0x4] sm:$0xf]
    %v31 = vld [vmem:[%s1 + $0x8] sm:$0xf]
    %v32 = vld [vmem:[%s1 + $0xc] sm:$0xf]
    %v33 = vld [vmem:[%s1 + $0x10] sm:$0xf]
    %v34 = vld [vmem:[%s1 + $0x14] sm:$0xf]
    %v35 = vld [vmem:[%s1 + $0x18] sm:$0xf]
    %v36 = vld [vmem:[%s1 + $0x1c] sm:$0xf]
    %v37 = vld [vmem:[%s1 + $0x20] sm:$0xf]
    %v38 = vld [vmem:[%s1 + $0x24] sm:$0xf]
    %v39 = vld [vmem:[%s1 + $0x28] sm:$0xf]
    %v40 = vld [vmem:[%s1 + $0x2c] sm:$0xf]
    %v41 = vld [vmem:[%s1 + $0x30] sm:$0xf]
    %v42 = vld [vmem:[%s1 + $0x34] sm:$0xf]
    %v43 = vld [vmem:[%s1 + $0x38] sm:$0xf]
    %v44 = vld [vmem:[%s1 + $0x3c] sm:$0xf]
    %v45 = vld [vmem:[%s2] sm:$0x1]
    %v47 = vlaneseq
    %v48 = vshrl.u32 %v47, 7
    %v49 = vsub.s32 0, %v48
    %v50 = vrot.slane %v45, %v49
    %v68 = vunpack.c.l.b16 %v29
    %v69 = vunpack.c.l.b16 %v30
    %v70 = vunpack.c.l.b16 %v31
    %v71 = vunpack.c.l.b16 %v32
    %v72 = vunpack.c.l.b16 %v33
    %v73 = vunpack.c.l.b16 %v34
    %v74 = vunpack.c.l.b16 %v35
    %v75 = vunpack.c.l.b16 %v36
    %v76 = vunpack.c.l.b16 %v37
    %v77 = vunpack.c.l.b16 %v38
    %v78 = vunpack.c.l.b16 %v39
    %v79 = vunpack.c.l.b16 %v40
    %v80 = vunpack.c.l.b16 %v41
    %v81 = vunpack.c.l.b16 %v42
    %v82 = vunpack.c.l.b16 %v43
    %v83 = vunpack.c.l.b16 %v44
    %v84 = vpack.c.b16 %v69, %v68
    %v85 = vpack.c.b16 %v71, %v70
    %v86 = vpack.c.b16 %v73, %v72
    %v87 = vpack.c.b16 %v75, %v74
    %v88 = vpack.c.b16 %v77, %v76
    %v89 = vpack.c.b16 %v79, %v78
    %v90 = vpack.c.b16 %v81, %v80
    %v91 = vpack.c.b16 %v83, %v82
    %100 = vmatprep.subr.bf16.mxu0 0
    %101 = vmatpush1.bf16.msra.mxu0 %v84
    %102 = vmatprep.subr.bf16.mxu0 0
    %103 = vmatpush1.bf16.msra.mxu0 %v85
    %104 = vmatprep.subr.bf16.mxu0 0
    %105 = vmatpush1.bf16.msra.mxu0 %v86
    %106 = vmatprep.subr.bf16.mxu0 0
    %107 = vmatpush1.bf16.msra.mxu0 %v87
    %108 = vmatprep.subr.bf16.mxu0 0
    %109 = vmatpush1.bf16.msra.mxu0 %v88
    %110 = vmatprep.subr.bf16.mxu0 0
    %111 = vmatpush1.bf16.msra.mxu0 %v89
    %112 = vmatprep.subr.bf16.mxu0 0
    %113 = vmatpush1.bf16.msra.mxu0 %v90
    %114 = vmatprep.subr.bf16.mxu0 0
    %115 = vmatpush1.bf16.msra.mxu0 %v91
    %116 = vmatprep.subr.bf16.mxu0 0
    %117 = vmatpush1.bf16.msra.mxu0 0
    %118 = vmatprep.subr.bf16.mxu0 0
    %119 = vmatpush1.bf16.msra.mxu0 0
    %120 = vmatprep.subr.bf16.mxu0 0
    %121 = vmatpush1.bf16.msra.mxu0 0
    %122 = vmatprep.subr.bf16.mxu0 0
    %123 = vmatpush1.bf16.msra.mxu0 0
    %124 = vmatprep.subr.bf16.mxu0 0
    %125 = vmatpush1.bf16.msra.mxu0 0
    %126 = vmatprep.subr.bf16.mxu0 0
    %127 = vmatpush1.bf16.msra.mxu0 0
    %128 = vmatprep.subr.bf16.mxu0 0
    %129 = vmatpush1.bf16.msra.mxu0 0
    %130 = vmatprep.subr.bf16.mxu0 0
    %131 = vmatpush1.bf16.msra.mxu0 0
    %132 = vmatprep.mubr.bf16.mxu0 0
    %133 = vmatmul.mubr.bf16.gmra.mrb[0].mxu0 %v28
    %v134 = vpop.f32.mrb[0].mxu0
    %v135 = vadd.f32 %v50, %v134
    %v136 = vpop.f32.mrb[0].mxu0
    %v137 = vpop.f32.mrb[0].mxu0
    %v138 = vpop.f32.mrb[0].mxu0
    %139 = vdwg.mxu0
    %v140 = vxor.u32 %v135, 2147483648
    %v141 = vmul.f32 %v140, 1.442695
    %v142 = vpow.pop %v141
    %v143 = vadd.f32 %v142, 1.0
    %v144 = vrcp.pop %v143
    %v145 = vmul.f32 1.0, %v144
    %v146 = vpack.c.bf16 %v145, %v145
    %v147 = vld [vmem:[%s3] sm:$0xf]
    %v148 = vld [vmem:[%s3 + $0x4] sm:$0xf]
    %v149 = vld [vmem:[%s3 + $0x8] sm:$0xf]
    %v150 = vld [vmem:[%s3 + $0xc] sm:$0xf]
    %v151 = vld [vmem:[%s3 + $0x10] sm:$0xf]
    %v152 = vld [vmem:[%s3 + $0x14] sm:$0xf]
    %v153 = vld [vmem:[%s3 + $0x18] sm:$0xf]
    %v154 = vld [vmem:[%s3 + $0x1c] sm:$0xf]
    %v155 = vld [vmem:[%s3 + $0x20] sm:$0xf]
    %v156 = vld [vmem:[%s3 + $0x24] sm:$0xf]
    %v157 = vld [vmem:[%s3 + $0x28] sm:$0xf]
    %v158 = vld [vmem:[%s3 + $0x2c] sm:$0xf]
    %v159 = vld [vmem:[%s3 + $0x30] sm:$0xf]
    %v160 = vld [vmem:[%s3 + $0x34] sm:$0xf]
    %v161 = vld [vmem:[%s3 + $0x38] sm:$0xf]
    %v162 = vld [vmem:[%s3 + $0x3c] sm:$0xf]
    %v163 = vld [vmem:[%s4] sm:$0x1]
    %v165 = vlaneseq
    %v166 = vshrl.u32 %v165, 7
    %v167 = vsub.s32 0, %v166
    %v168 = vrot.slane %v163, %v167
    %v186 = vunpack.c.l.b16 %v147
    %v187 = vunpack.c.l.b16 %v148
    %v188 = vunpack.c.l.b16 %v149
    %v189 = vunpack.c.l.b16 %v150
    %v190 = vunpack.c.l.b16 %v151
    %v191 = vunpack.c.l.b16 %v152
    %v192 = vunpack.c.l.b16 %v153
    %v193 = vunpack.c.l.b16 %v154
    %v194 = vunpack.c.l.b16 %v155
    %v195 = vunpack.c.l.b16 %v156
    %v196 = vunpack.c.l.b16 %v157
    %v197 = vunpack.c.l.b16 %v158
    %v198 = vunpack.c.l.b16 %v159
    %v199 = vunpack.c.l.b16 %v160
    %v200 = vunpack.c.l.b16 %v161
    %v201 = vunpack.c.l.b16 %v162
    %v202 = vpack.c.b16 %v187, %v186
    %v203 = vpack.c.b16 %v189, %v188
    %v204 = vpack.c.b16 %v191, %v190
    %v205 = vpack.c.b16 %v193, %v192
    %v206 = vpack.c.b16 %v195, %v194
    %v207 = vpack.c.b16 %v197, %v196
    %v208 = vpack.c.b16 %v199, %v198
    %v209 = vpack.c.b16 %v201, %v200
    %218 = vmatprep.subr.bf16.mxu0 0
    %219 = vmatpush1.bf16.msra.mxu0 %v202
    %220 = vmatprep.subr.bf16.mxu0 0
    %221 = vmatpush1.bf16.msra.mxu0 %v203
    %222 = vmatprep.subr.bf16.mxu0 0
    %223 = vmatpush1.bf16.msra.mxu0 %v204
    %224 = vmatprep.subr.bf16.mxu0 0
    %225 = vmatpush1.bf16.msra.mxu0 %v205
    %226 = vmatprep.subr.bf16.mxu0 0
    %227 = vmatpush1.bf16.msra.mxu0 %v206
    %228 = vmatprep.subr.bf16.mxu0 0
    %229 = vmatpush1.bf16.msra.mxu0 %v207
    %230 = vmatprep.subr.bf16.mxu0 0
    %231 = vmatpush1.bf16.msra.mxu0 %v208
    %232 = vmatprep.subr.bf16.mxu0 0
    %233 = vmatpush1.bf16.msra.mxu0 %v209
    %234 = vmatprep.subr.bf16.mxu0 0
    %235 = vmatpush1.bf16.msra.mxu0 0
    %236 = vmatprep.subr.bf16.mxu0 0
    %237 = vmatpush1.bf16.msra.mxu0 0
    %238 = vmatprep.subr.bf16.mxu0 0
    %239 = vmatpush1.bf16.msra.mxu0 0
    %240 = vmatprep.subr.bf16.mxu0 0
    %241 = vmatpush1.bf16.msra.mxu0 0
    %242 = vmatprep.subr.bf16.mxu0 0
    %243 = vmatpush1.bf16.msra.mxu0 0
    %244 = vmatprep.subr.bf16.mxu0 0
    %245 = vmatpush1.bf16.msra.mxu0 0
    %246 = vmatprep.subr.bf16.mxu0 0
    %247 = vmatpush1.bf16.msra.mxu0 0
    %248 = vmatprep.subr.bf16.mxu0 0
    %249 = vmatpush1.bf16.msra.mxu0 0
    %250 = vmatprep.mubr.bf16.mxu0 0
    %251 = vmatmul.mubr.bf16.gmra.mrb[0].mxu0 %v146
    %v252 = vpop.f32.mrb[0].mxu0
    %v253 = vadd.f32 %v168, %v252
    %v254 = vpop.f32.mrb[0].mxu0
    %v255 = vpop.f32.mrb[0].mxu0
    %v256 = vpop.f32.mrb[0].mxu0
    %257 = vdwg.mxu0
    %v258 = vxor.u32 %v253, 2147483648
    %v259 = vmul.f32 %v258, 1.442695
    %v260 = vpow.pop %v259
    %v261 = vadd.f32 %v260, 1.0
    %v262 = vrcp.pop %v261
    %v263 = vmul.f32 1.0, %v262
    %v264 = vpack.c.bf16 %v263, %v263
    %v265 = vld [vmem:[%s5] sm:$0xf]
    %v266 = vld [vmem:[%s5 + $0x4] sm:$0xf]
    %v267 = vld [vmem:[%s5 + $0x8] sm:$0xf]
    %v268 = vld [vmem:[%s5 + $0xc] sm:$0xf]
    %v269 = vld [vmem:[%s5 + $0x10] sm:$0xf]
    %v270 = vld [vmem:[%s5 + $0x14] sm:$0xf]
    %v271 = vld [vmem:[%s5 + $0x18] sm:$0xf]
    %v272 = vld [vmem:[%s5 + $0x1c] sm:$0xf]
    %v273 = vld [vmem:[%s5 + $0x20] sm:$0xf]
    %v274 = vld [vmem:[%s5 + $0x24] sm:$0xf]
    %v275 = vld [vmem:[%s5 + $0x28] sm:$0xf]
    %v276 = vld [vmem:[%s5 + $0x2c] sm:$0xf]
    %v277 = vld [vmem:[%s5 + $0x30] sm:$0xf]
    %v278 = vld [vmem:[%s5 + $0x34] sm:$0xf]
    %v279 = vld [vmem:[%s5 + $0x38] sm:$0xf]
    %v280 = vld [vmem:[%s5 + $0x3c] sm:$0xf]
    %v281 = vld [vmem:[%s6] sm:$0x1]
    %v283 = vlaneseq
    %v284 = vshrl.u32 %v283, 7
    %v285 = vsub.s32 0, %v284
    %v286 = vrot.slane %v281, %v285
    %v304 = vunpack.c.l.b16 %v265
    %v305 = vunpack.c.l.b16 %v266
    %v306 = vunpack.c.l.b16 %v267
    %v307 = vunpack.c.l.b16 %v268
    %v308 = vunpack.c.l.b16 %v269
    %v309 = vunpack.c.l.b16 %v270
    %v310 = vunpack.c.l.b16 %v271
    %v311 = vunpack.c.l.b16 %v272
    %v312 = vunpack.c.l.b16 %v273
    %v313 = vunpack.c.l.b16 %v274
    %v314 = vunpack.c.l.b16 %v275
    %v315 = vunpack.c.l.b16 %v276
    %v316 = vunpack.c.l.b16 %v277
    %v317 = vunpack.c.l.b16 %v278
    %v318 = vunpack.c.l.b16 %v279
    %v319 = vunpack.c.l.b16 %v280
    %v320 = vpack.c.b16 %v305, %v304
    %v321 = vpack.c.b16 %v307, %v306
    %v322 = vpack.c.b16 %v309, %v308
    %v323 = vpack.c.b16 %v311, %v310
    %v324 = vpack.c.b16 %v313, %v312
    %v325 = vpack.c.b16 %v315, %v314
    %v326 = vpack.c.b16 %v317, %v316
    %v327 = vpack.c.b16 %v319, %v318
    %336 = vmatprep.subr.bf16.mxu0 0
    %337 = vmatpush1.bf16.msra.mxu0 %v320
    %338 = vmatprep.subr.bf16.mxu0 0
    %339 = vmatpush1.bf16.msra.mxu0 %v321
    %340 = vmatprep.subr.bf16.mxu0 0
    %341 = vmatpush1.bf16.msra.mxu0 %v322
    %342 = vmatprep.subr.bf16.mxu0 0
    %343 = vmatpush1.bf16.msra.mxu0 %v323
    %344 = vmatprep.subr.bf16.mxu0 0
    %345 = vmatpush1.bf16.msra.mxu0 %v324
    %346 = vmatprep.subr.bf16.mxu0 0
    %347 = vmatpush1.bf16.msra.mxu0 %v325
    %348 = vmatprep.subr.bf16.mxu0 0
    %349 = vmatpush1.bf16.msra.mxu0 %v326
    %350 = vmatprep.subr.bf16.mxu0 0
    %351 = vmatpush1.bf16.msra.mxu0 %v327
    %352 = vmatprep.subr.bf16.mxu0 0
    %353 = vmatpush1.bf16.msra.mxu0 0
    %354 = vmatprep.subr.bf16.mxu0 0
    %355 = vmatpush1.bf16.msra.mxu0 0
    %356 = vmatprep.subr.bf16.mxu0 0
    %357 = vmatpush1.bf16.msra.mxu0 0
    %358 = vmatprep.subr.bf16.mxu0 0
    %359 = vmatpush1.bf16.msra.mxu0 0
    %360 = vmatprep.subr.bf16.mxu0 0
    %361 = vmatpush1.bf16.msra.mxu0 0
    %362 = vmatprep.subr.bf16.mxu0 0
    %363 = vmatpush1.bf16.msra.mxu0 0
    %364 = vmatprep.subr.bf16.mxu0 0
    %365 = vmatpush1.bf16.msra.mxu0 0
    %366 = vmatprep.subr.bf16.mxu0 0
    %367 = vmatpush1.bf16.msra.mxu0 0
    %368 = vmatprep.mubr.bf16.mxu0 0
    %369 = vmatmul.mubr.bf16.gmra.mrb[0].mxu0 %v264
    %v370 = vpop.f32.mrb[0].mxu0
    %v371 = vadd.f32 %v286, %v370
    %v372 = vpop.f32.mrb[0].mxu0
    %v373 = vpop.f32.mrb[0].mxu0
    %v374 = vpop.f32.mrb[0].mxu0
    %375 = vdwg.mxu0
    %v376 = vxor.u32 %v371, 2147483648
    %v377 = vmul.f32 %v376, 1.442695
    %v378 = vpow.pop %v377
    %v379 = vadd.f32 %v378, 1.0
    %v380 = vrcp.pop %v379
    %v381 = vmul.f32 1.0, %v380
    %382 = vst [vmem:[#allocation2] sm:$0xff] %v381
    // Predicated region
    $region30: #{mlp_forward.1} parent=1 // pred_check
      _
    $region31: #{mlp_forward.1} parent=1 // pred_check_branch
      %384 = sbr.rel (0) target = $region33
    $region32: #{mlp_forward.1} parent=1 // pred_region
      %s386 = ssub.s32 128, 128
      %387 = vsyncadd [#allocation3], %s386
      %s389 = sshll.u32 [#allocation2], 4
      %s390 = int_to_ptr.vmem [resolvable:$true] %s389
      %392 = dma.vmem_to_hbm [thread:$0]  %s390, 128, %s7, [#allocation3]
    $region33: #{mlp_forward.1} parent=1 // pred_fallthru
      _
    // Predicated region
    $region34: #{mlp_forward.1} parent=1 // pred_check
      _
    $region35: #{mlp_forward.1} parent=1 // pred_check_branch
      %394 = sbr.rel (0) target = $region37
    $region36: #{mlp_forward.1} parent=1 // pred_region
      %395 = dma.done [#allocation3], 128
    $region37: #{mlp_forward.1} parent=1 // pred_fallthru
      _
    %396 = vsyncpa [#allocation3], 1

</llo_original>
